<compile_context>
chip_gen: v5e
topology: v5e:2x2
jax: 0.10.0
libtpu: 0.0.40
codegen_flags: <defaults>
</compile_context>

<pallas_src>
import math
import jax
import jax.numpy as jnp
from jax.experimental import pallas as pl
from jax.experimental.pallas import tpu as pltpu

SUBLANE = 8


def _round_up(x, m):
    return ((x + m - 1) // m) * m


def mlp_kernel(x_ref, w1_ref, b1_ref, w2_ref, b2_ref, o_ref):
    # Fused 2-layer MLP tile: bf16 MXU matmuls, f32 accumulation,
    # f32 bias + sigmoid epilogue (EUP), f32 output.
    x = x_ref[...].astype(jnp.bfloat16)                       # [tb, d_in]
    h = jnp.dot(x, w1_ref[...],
                preferred_element_type=jnp.float32)           # [tb, H] f32
    h = jax.nn.sigmoid(h + b1_ref[...])                       # f32 sigmoid
    y = jnp.dot(h.astype(jnp.bfloat16), w2_ref[...],
                preferred_element_type=jnp.float32)           # [tb, d_out] f32
    o_ref[...] = (y + b2_ref[...]).astype(o_ref.dtype)


def prepare_params(w1, b1, w2, b2):
    """One-time preprocessing (hoisted out of the forward pass).

    Weights are stored transposed w.r.t. PyTorch's nn.Linear ([in, out]) and
    cast to bf16 for the MXU; biases become f32 row vectors for the f32
    epilogue.
    """
    return (
        w1.astype(jnp.bfloat16),                 # [d_in, H]
        b1.astype(jnp.float32).reshape(1, -1),   # [1, H]
        w2.astype(jnp.bfloat16),                 # [H, d_out]
        b2.astype(jnp.float32).reshape(1, -1),   # [1, d_out]
    )


def network_forward(x, w1b, b1r, w2b, b2r, *, tile_b=2048, out_dtype=jnp.float32):
    """x: [B, d_in] (native dtype); params as returned by prepare_params."""
    B, d_in = x.shape
    H = w1b.shape[1]
    d_out = w2b.shape[1]

    # --- batch tiling (no feature-dim padding at all) ---------------------
    B_ceil = _round_up(B, SUBLANE)
    tile_b = _round_up(max(SUBLANE, min(tile_b, B_ceil)), SUBLANE)
    # Prefer >=2 grid steps so the "parallel" batch axis can shard across the
    # two TensorCores on v7x (harmless ~0.35us extra step on v5e/v6e).
    if B_ceil >= 2 * SUBLANE and tile_b >= B_ceil:
        tile_b = _round_up((B_ceil + 1) // 2, SUBLANE)
    grid_b = -(-B // tile_b)          # cdiv
    B_p = grid_b * tile_b

    # Pad batch only when needed (zeros; padded rows sliced off below).
    if B_p != B:
        xp = jnp.zeros((B_p, d_in), x.dtype).at[:B, :].set(x)
    else:
        xp = x

    cost = pl.CostEstimate(
        flops=2 * B_p * (d_in * H + H * d_out),
        transcendentals=B_p * H,                               # sigmoid exp
        bytes_accessed=(B_p * d_in * x.dtype.itemsize
                        + d_in * H * 2 + H * d_out * 2         # bf16 weights
                        + H * 4 + d_out * 4                    # f32 biases
                        + B_p * d_out * 4),                    # f32 output
    )

    out_p = pl.pallas_call(
        mlp_kernel,
        out_shape=jax.ShapeDtypeStruct((B_p, d_out), jnp.float32),
        grid_spec=pltpu.PrefetchScalarGridSpec(
            num_scalar_prefetch=0,
            grid=(grid_b,),
            in_specs=[
                # Streamed per-step: x tile.  Last dim == full array dim (16),
                # so no 128-lane padding is required.
                pl.BlockSpec((tile_b, d_in), lambda i: (i, 0)),
                # VMEM-resident weights/biases (constant index_map, full-array
                # blocks -> single DMA, no padding).
                pl.BlockSpec((d_in, H), lambda i: (0, 0)),
                pl.BlockSpec((1, H), lambda i: (0, 0)),
                pl.BlockSpec((H, d_out), lambda i: (0, 0)),
                pl.BlockSpec((1, d_out), lambda i: (0, 0)),
            ],
            # Output last dim == full array dim (4): legal, lane-narrow stores
            # beat 32x write amplification for this mem-bound kernel.
            out_specs=pl.BlockSpec((tile_b, d_out), lambda i: (i, 0)),
        ),
        compiler_params=pltpu.CompilerParams(
            dimension_semantics=("parallel",),
        ),
        cost_estimate=cost,
    )(xp, w1b, b1r, w2b, b2r)

    out = out_p[:B, :] if B_p != B else out_p
    return out.astype(out_dtype)


def init_params(key, d_in, hidden, d_out):
    # Mimics torch.nn.Linear default init U(-1/sqrt(fan_in), 1/sqrt(fan_in));
    # weights kept transposed ([in, out]) for row-major matmuls.
    k1, k2, k3, k4 = jax.random.split(key, 4)
    bound1 = 1.0 / math.sqrt(d_in)
    bound2 = 1.0 / math.sqrt(hidden)
    w1 = jax.random.uniform(k1, (d_in, hidden), jnp.float32, -bound1, bound1)
    b1 = jax.random.uniform(k2, (hidden,), jnp.float32, -bound1, bound1)
    w2 = jax.random.uniform(k3, (hidden, d_out), jnp.float32, -bound2, bound2)
    b2 = jax.random.uniform(k4, (d_out,), jnp.float32, -bound2, bound2)
    return w1, b1, w2, b2


if __name__ == "__main__":
    # Shapes implied by the module: input_dim = X.shape[1], hidden_layers = 64,
    # output_dim = num_classes.  Small, deterministic synthetic sizes.
    batch = 8
    input_dim = 16
    hidden_layers = 64
    output_dim = 4

    key = jax.random.PRNGKey(0)
    kx, kp = jax.random.split(key)
    x = jax.random.uniform(kx, (batch, input_dim), jnp.float32)
    # Mirrors the X = (X - min) / (max - min) normalization -> values in [0, 1].
    x = (x - x.min()) / (x.max() - x.min())

    w1, b1, w2, b2 = init_params(kp, input_dim, hidden_layers, output_dim)

    # One-time parameter preprocessing (hoisted out of the forward pass).
    params = prepare_params(w1, b1, w2, b2)
    params = jax.tree_util.tree_map(jax.block_until_ready, params)

    out = network_forward(x, *params)
    out = jax.block_until_ready(out)

    # Pure-JAX f32 reference (kernel uses bf16 matmul inputs -> looser tol).
    ref = jnp.dot(jax.nn.sigmoid(jnp.dot(x, w1) + b1), w2) + b2
    assert out.shape == (batch, output_dim)
    assert jnp.allclose(out, ref, atol=2e-2, rtol=2e-2)

    print("KERNEL_OK")
</pallas_src>

<mosaic_0001>
module attributes {stable_mosaic.version = 11 : i64} {
  func.func @mlp_kernel(%arg0: i32, %arg1: memref<8x16xf32, #tpu.memory_space<vmem>>, %arg2: memref<16x64xbf16, #tpu.memory_space<vmem>>, %arg3: memref<1x64xf32, #tpu.memory_space<vmem>>, %arg4: memref<64x4xbf16, #tpu.memory_space<vmem>>, %arg5: memref<1x4xf32, #tpu.memory_space<vmem>>, %arg6: memref<8x4xf32, #tpu.memory_space<vmem>>) attributes {dimension_semantics = [#tpu.dimension_semantics<parallel>], iteration_bounds = array<i64: 1>, scalar_prefetch = 0 : i64, scratch_operands = 0 : i64, tpu.core_type = #tpu.core_type<tc>, window_params = [{transform_indices = @transform_0, window_bounds = array<i64: 8, 16>}, {pipeline_mode = #tpu.pipeline_mode<synchronous>, transform_indices = @transform_1, window_bounds = array<i64: 16, 64>}, {pipeline_mode = #tpu.pipeline_mode<synchronous>, transform_indices = @transform_2, window_bounds = array<i64: 1, 64>}, {pipeline_mode = #tpu.pipeline_mode<synchronous>, transform_indices = @transform_3, window_bounds = array<i64: 64, 4>}, {pipeline_mode = #tpu.pipeline_mode<synchronous>, transform_indices = @transform_4, window_bounds = array<i64: 1, 4>}, {transform_indices = @transform_5, window_bounds = array<i64: 8, 4>}]} {
    %c0 = arith.constant 0 : index
    %c0_0 = arith.constant 0 : index
    %0 = vector.load %arg1[%c0, %c0_0] : memref<8x16xf32, #tpu.memory_space<vmem>>, vector<8x16xf32>
    %1 = arith.truncf %0 : vector<8x16xf32> to vector<8x16xbf16>
    %c0_1 = arith.constant 0 : index
    %c0_2 = arith.constant 0 : index
    %2 = vector.load %arg2[%c0_1, %c0_2] : memref<16x64xbf16, #tpu.memory_space<vmem>>, vector<16x64xbf16>
    %cst = arith.constant dense<0.000000e+00> : vector<8x64xf32>
    %3 = tpu.matmul %1, %2, %cst {dimension_numbers = #tpu.dot_dimension_numbers<[1], [0], [0], [1], [0, 0, 1, 1], [], []>} : vector<8x16xbf16>, vector<16x64xbf16>, vector<8x64xf32> -> vector<8x64xf32>
    %c0_3 = arith.constant 0 : index
    %c0_4 = arith.constant 0 : index
    %4 = vector.load %arg3[%c0_3, %c0_4] : memref<1x64xf32, #tpu.memory_space<vmem>>, vector<1x64xf32>
    %5 = vector.broadcast %4 : vector<1x64xf32> to vector<8x64xf32>
    %6 = arith.addf %3, %5 : vector<8x64xf32>
    %7 = arith.negf %6 : vector<8x64xf32>
    %8 = math.exp %7 : vector<8x64xf32>
    %cst_5 = arith.constant 1.000000e+00 : f32
    %9 = vector.broadcast %cst_5 : f32 to vector<8x64xf32>
    %10 = arith.addf %9, %8 : vector<8x64xf32>
    %11 = arith.divf %9, %10 : vector<8x64xf32>
    %12 = arith.truncf %11 : vector<8x64xf32> to vector<8x64xbf16>
    %c0_6 = arith.constant 0 : index
    %c0_7 = arith.constant 0 : index
    %13 = vector.load %arg4[%c0_6, %c0_7] : memref<64x4xbf16, #tpu.memory_space<vmem>>, vector<64x4xbf16>
    %cst_8 = arith.constant dense<0.000000e+00> : vector<8x4xf32>
    %14 = tpu.matmul %12, %13, %cst_8 {dimension_numbers = #tpu.dot_dimension_numbers<[1], [0], [0], [1], [0, 0, 1, 1], [], []>} : vector<8x64xbf16>, vector<64x4xbf16>, vector<8x4xf32> -> vector<8x4xf32>
    %c0_9 = arith.constant 0 : index
    %c0_10 = arith.constant 0 : index
    %15 = vector.load %arg5[%c0_9, %c0_10] : memref<1x4xf32, #tpu.memory_space<vmem>>, vector<1x4xf32>
    %16 = vector.broadcast %15 : vector<1x4xf32> to vector<8x4xf32>
    %17 = arith.addf %14, %16 : vector<8x4xf32>
    %c0_11 = arith.constant 0 : index
    %c0_12 = arith.constant 0 : index
    %18 = vector.load %arg6[%c0_11, %c0_12] : memref<8x4xf32, #tpu.memory_space<vmem>>, vector<8x4xf32>
    tpu.vector_store %arg6[%c0_11, %c0_12], %17 {strides = array<i32>} : memref<8x4xf32, #tpu.memory_space<vmem>>, vector<8x4xf32>,
    return
  }
  func.func @transform_0(%arg0: i32) -> (i32, i32) {
    %c0_i32 = arith.constant 0 : i32
    %c0_i32_0 = arith.constant 0 : i32
    return %arg0, %c0_i32 : i32, i32
  }
  func.func @transform_1(%arg0: i32) -> (i32, i32) {
    %c0_i32 = arith.constant 0 : i32
    %c0_i32_0 = arith.constant 0 : i32
    %c0_i32_1 = arith.constant 0 : i32
    return %c0_i32, %c0_i32_0 : i32, i32
  }
  func.func @transform_2(%arg0: i32) -> (i32, i32) {
    %c0_i32 = arith.constant 0 : i32
    %c0_i32_0 = arith.constant 0 : i32
    %c0_i32_1 = arith.constant 0 : i32
    return %c0_i32, %c0_i32_0 : i32, i32
  }
  func.func @transform_3(%arg0: i32) -> (i32, i32) {
    %c0_i32 = arith.constant 0 : i32
    %c0_i32_0 = arith.constant 0 : i32
    %c0_i32_1 = arith.constant 0 : i32
    return %c0_i32, %c0_i32_0 : i32, i32
  }
  func.func @transform_4(%arg0: i32) -> (i32, i32) {
    %c0_i32 = arith.constant 0 : i32
    %c0_i32_0 = arith.constant 0 : i32
    %c0_i32_1 = arith.constant 0 : i32
    return %c0_i32, %c0_i32_0 : i32, i32
  }
  func.func @transform_5(%arg0: i32) -> (i32, i32) {
    %c0_i32 = arith.constant 0 : i32
    %c0_i32_0 = arith.constant 0 : i32
    return %arg0, %c0_i32 : i32, i32
  }
}

</mosaic_0001>

<llo_original>
// kernel: tpu_custom_call.1
$region0: #{tpu_custom_call.1}
  #allocation0 [shape = 'u32[]', space=smem, size = 0x4, offset = 0x4, fixed_abs, tag = 'smem constant byte address 0x4 - core index']
  #allocation1 [shape = 'u32[72,128]{1,0:T(1,128)}', space=vmem, size = 0x9000, scoped, tag = 'internal scratch']
  %s0 = inlined_call_operand.vmem [shape: f32[8,16], index: 0, kind: input, shape index: {}]
  %s1 = inlined_call_operand.vmem [shape: bf16[16,64], index: 1, kind: input, shape index: {}]
  %s2 = inlined_call_operand.vmem [shape: f32[1,64], index: 2, kind: input, shape index: {}]
  %s3 = inlined_call_operand.vmem [shape: bf16[64,4], index: 3, kind: input, shape index: {}]
  %s4 = inlined_call_operand.vmem [shape: f32[1,4], index: 4, kind: input, shape index: {}]
  %s5 = inlined_call_operand.vmem [shape: f32[8,4], index: 5, kind: output, shape index: {}]
  %s6 = sld [smem:[#allocation0]]
  $region30: #{tpu_custom_call.1} parent=0
    _
  %s8 = ssub.s32 1, %s6
  %s9 = scalar_select 0, %s8, %s6
  // Predicated region
  $region2: #{tpu_custom_call.1} parent=0 // pred_check
    _
  $region3: #{tpu_custom_call.1} parent=0 // pred_check_branch
    %11 = sbr.rel (0) target = $region5
  $region4: #{tpu_custom_call.1} parent=0 // pred_region
    _
  $region5: #{tpu_custom_call.1} parent=0 // pred_fallthru
    _
  // Predicated region
  $region6: #{tpu_custom_call.1} parent=0 // pred_check
    _
  $region7: #{tpu_custom_call.1} parent=0 // pred_check_branch
    %13 = sbr.rel (0) target = $region9
  $region8: #{tpu_custom_call.1} parent=0 // pred_region
    _
  $region9: #{tpu_custom_call.1} parent=0 // pred_fallthru
    _
  // Predicated region
  $region10: #{tpu_custom_call.1} parent=0 // pred_check
    _
  $region11: #{tpu_custom_call.1} parent=0 // pred_check_branch
    %15 = sbr.rel (0) target = $region13
  $region12: #{tpu_custom_call.1} parent=0 // pred_region
    _
  $region13: #{tpu_custom_call.1} parent=0 // pred_fallthru
    _
  // Predicated region
  $region14: #{tpu_custom_call.1} parent=0 // pred_check
    _
  $region15: #{tpu_custom_call.1} parent=0 // pred_check_branch
    %17 = sbr.rel (0) target = $region17
  $region16: #{tpu_custom_call.1} parent=0 // pred_region
    _
  $region17: #{tpu_custom_call.1} parent=0 // pred_fallthru
    _
  // Predicated region
  $region18: #{tpu_custom_call.1} parent=0 // pred_check
    _
  $region19: #{tpu_custom_call.1} parent=0 // pred_check_branch
    %19 = sbr.rel (0) target = $region21
  $region20: #{tpu_custom_call.1} parent=0 // pred_region
    _
  $region21: #{tpu_custom_call.1} parent=0 // pred_fallthru
    _
  %v21 = vld [vmem:[%s0] sm:$0xff]
  %v22 = vpack.c.bf16 %v21, %v21
  %v23 = vld [vmem:[%s1] sm:$0xf]
  %v24 = vld [vmem:[%s1 + $0x4] sm:$0xf]
  %v25 = vld [vmem:[%s2] sm:$0x1]
  %v27 = vperm.slane %v25, 0
  %v31 = vunpack.c.l.b16 %v23
  %v32 = vunpack.c.l.b16 %v24
  %v33 = vpack.c.b16 %v32, %v31
  %vm35 = vcmask 130048
  %v37 = vsel %vm35, %v22, 0
  %39 = vmatpush.bf16.msra.mxu0 0
  %40 = vmatpush.bf16.msra.mxu0 0
  %41 = vmatpush.bf16.msra.mxu0 0
  %42 = vmatpush.bf16.msra.mxu0 0
  %43 = vmatpush.bf16.msra.mxu0 0
  %44 = vmatpush.bf16.msra.mxu0 0
  %45 = vmatpush.bf16.msra.mxu0 0
  %46 = vmatpush.bf16.msra.mxu0 %v33
  %47 = vmatmul.bf16.gmra.mxu0 %v37
  %v48 = vpop.f32.mrf.mxu0
  %v49 = vadd.f32 %v27, %v48
  %v50 = vpop.f32.mrf.mxu0
  %51 = vdwg.mxu0
  %v52 = vxor.u32 %v49, 2147483648
  %v53 = vmul.f32 %v52, 1.442695
  %v54 = vpow.pop %v53
  %v55 = vadd.f32 %v54, 1.0
  %v56 = vrcp.pop %v55
  %v57 = vmul.f32 %v55, %v56
  %v58 = vsub.f32 1.0, %v57
  %v59 = vmul.f32 %v56, %v58
  %v60 = vadd.f32 %v56, %v59
  %vm61 = vweird.f32 %v55
  %vm62 = vweird.f32 %v56
  %vm63 = vmor %vm61, %vm62
  %v64 = vsel %vm63, %v56, %v60
  %v65 = vand.u32 2147483647, %v55
  %vm66 = vcmp.eq.f32.partialorder %v65, 8.507059e+37
  %v67 = vand.u32 %v55, 2147483648
  %v68 = vor.u32 1.1754944e-38, %v67
  %v69 = vsel %vm66, %v68, %v64
  %v70 = vmul.f32 1.0, %v69
  %v71 = vpack.c.bf16 %v70, %v70
  %v72 = vld [vmem:[%s3] sm:$0xf]
  %v73 = vld [vmem:[%s3 + $0x4] sm:$0xf]
  %v74 = vld [vmem:[%s3 + $0x8] sm:$0xf]
  %v75 = vld [vmem:[%s3 + $0xc] sm:$0xf]
  %v76 = vld [vmem:[%s3 + $0x10] sm:$0xf]
  %v77 = vld [vmem:[%s3 + $0x14] sm:$0xf]
  %v78 = vld [vmem:[%s3 + $0x18] sm:$0xf]
  %v79 = vld [vmem:[%s3 + $0x1c] sm:$0xf]
  %v80 = vld [vmem:[%s4] sm:$0x1]
  %v82 = vperm.slane %v80, 0
  %v92 = vunpack.c.l.b16 %v72
  %v93 = vunpack.c.l.b16 %v73
  %v94 = vunpack.c.l.b16 %v74
  %v95 = vunpack.c.l.b16 %v75
  %v96 = vunpack.c.l.b16 %v76
  %v97 = vunpack.c.l.b16 %v77
  %v98 = vunpack.c.l.b16 %v78
  %v99 = vunpack.c.l.b16 %v79
  %v100 = vpack.c.b16 %v93, %v92
  %v101 = vpack.c.b16 %v95, %v94
  %v102 = vpack.c.b16 %v97, %v96
  %v103 = vpack.c.b16 %v99, %v98
  %vm108 = vcmask 523264
  %v110 = vsel %vm108, %v71, 0
  %112 = vmatpush.bf16.msra.mxu0 0
  %113 = vmatpush.bf16.msra.mxu0 0
  %114 = vmatpush.bf16.msra.mxu0 0
  %115 = vmatpush.bf16.msra.mxu0 0
  %116 = vmatpush.bf16.msra.mxu0 %v103
  %117 = vmatpush.bf16.msra.mxu0 %v102
  %118 = vmatpush.bf16.msra.mxu0 %v101
  %119 = vmatpush.bf16.msra.mxu0 %v100
  %120 = vmatmul.bf16.gmra.mxu0 %v110
  %v121 = vpop.f32.mrf.mxu0
  %v122 = vadd.f32 %v82, %v121
  %v123 = vpop.f32.mrf.mxu0
  %124 = vdwg.mxu0
  %vm125 = vcmask 31744
  %126 = vst.msk [vmem:[%s5] sm:$0xff] %vm125, %v122
  // Predicated region
  $region22: #{tpu_custom_call.1} parent=0 // pred_check
    _
  $region23: #{tpu_custom_call.1} parent=0 // pred_check_branch
    %128 = sbr.rel (0) target = $region25
  $region24: #{tpu_custom_call.1} parent=0 // pred_region
    _
  $region25: #{tpu_custom_call.1} parent=0 // pred_fallthru
    _
  // Predicated region
  $region26: #{tpu_custom_call.1} parent=0 // pred_check
    _
  $region27: #{tpu_custom_call.1} parent=0 // pred_check_branch
    %130 = sbr.rel (0) target = $region29
  $region28: #{tpu_custom_call.1} parent=0 // pred_region
    _
  $region29: #{tpu_custom_call.1} parent=0 // pred_fallthru
    _

</llo_original>
